<compile_context>
chip_gen: v6e
topology: v6e:2x2x1
jax: 0.10.0
libtpu: 0.0.40
codegen_flags: <defaults>
</compile_context>

<pallas_src>
import math

import jax
import jax.numpy as jnp
from jax.experimental import pallas as pl
from jax.experimental.pallas import tpu as pltpu

LN_EPS = 1e-5
_LANE = 128
_SUBLANE = 8


def _round_up(v, m):
    return ((v + m - 1) // m) * m


def token_classifier_kernel(x_ref, gamma_ref, beta_ref,
                            w1_ref, b1_ref, w2_ref, b2_ref, o_ref):
    # ---- LayerNorm over the feature (lane) dim, stats in f32 ----
    x = x_ref[...].astype(jnp.float32)                         # [TN, D]
    mean = jnp.mean(x, axis=-1, keepdims=True)
    centered = x - mean
    var = jnp.mean(centered * centered, axis=-1, keepdims=True)
    xn = centered * jax.lax.rsqrt(var + LN_EPS)
    xn = xn * gamma_ref[...] + beta_ref[...]                    # affine, broadcast [1, D]

    # Dropout is identity in eval/inference mode.
    # TODO(synk): training-mode dropout (pltpu.prng_random_bits mask) not implemented.

    # ---- fc: Linear(D -> H2p) on the MXU, bf16 operands, f32 accumulate ----
    h = jnp.dot(xn.astype(jnp.bfloat16), w1_ref[...],
                preferred_element_type=jnp.float32) + b1_ref[...]

    # ---- exact GELU (erf form, matches torch nn.GELU() default) ----
    # (tanh approximation would move this to the EUP slot; only worth it if the
    #  bundle dump shows the VALU slot saturating — this kernel is HBM-bound.)
    g = 0.5 * h * (1.0 + jax.lax.erf(h * jnp.float32(1.0 / math.sqrt(2.0))))

    # ---- output_layer: H2p -> 1 as VPU multiply + lane (XLU) reduce ----
    out = jnp.sum(g * w2_ref[...], axis=-1, keepdims=True) + b2_ref[0]
    o_ref[...] = out.astype(o_ref.dtype)


def _vmem_limit_bytes():
    """Generation-aware VMEM limit: ~85% of physical, capped below 100 MiB."""
    cap = 64 * 1024 * 1024                      # conservative fallback (v7x per-TC)
    try:
        info = pltpu.get_tpu_info()
        cap = int(getattr(info, "vmem_capacity_bytes", cap))
    except Exception:
        pass
    return min(int(cap * 0.85), 100 * 1024 * 1024)


def _choose_tile_n(n_rows, d, h2p, x_bytes, vmem_limit, resident_bytes):
    """Largest row tile (multiple of 8) whose working set fits the VMEM budget."""
    per_row = (2 * d * x_bytes      # x tile, double-buffered (streamed dtype)
               + 2 * 1 * 4          # out tile, double-buffered
               + 5 * d * 4          # LN intermediates (f32 x, centered, xn, affine, bf16 cast)
               + 3 * h2p * 4)       # h / gelu / weighted-product temporaries (f32)
    budget = vmem_limit - resident_bytes - (2 << 20)   # margin for Mosaic scratch / padding
    tile = (budget // max(per_row, 1)) // _SUBLANE * _SUBLANE
    tile = max(tile, _SUBLANE)
    # v7x has two TensorCores: keep at least two grid steps when N allows, so the
    # "parallel" row axis actually feeds both cores.
    half = _round_up(pl.cdiv(n_rows, 2), _SUBLANE)
    tile = min(tile, half)
    if tile >= n_rows:
        return n_rows               # single full-extent block (always a legal block shape)
    return tile


def prepare_params(params):
    """One-time conversion of torch-layout params into kernel-ready layouts.

    Do this once at init / load time — NOT per forward call — so w1 is not
    re-read/re-written in HBM on every step.
    """
    gamma, beta, w1, b1, w2, b2 = params
    D, H2 = w1.shape
    H2p = _round_up(H2, _LANE)      # 256-padding only pays off if MXU-bound (v6e/v7x)

    gamma2 = jnp.asarray(gamma, jnp.float32).reshape(1, D)
    beta2 = jnp.asarray(beta, jnp.float32).reshape(1, D)
    w1p = jnp.pad(jnp.asarray(w1, jnp.float32),
                  ((0, 0), (0, H2p - H2))).astype(jnp.bfloat16)            # [D, H2p]
    b1p = jnp.pad(jnp.asarray(b1, jnp.float32).reshape(1, H2),
                  ((0, 0), (0, H2p - H2)))                                 # [1, H2p]
    w2p = jnp.pad(jnp.asarray(w2, jnp.float32).reshape(1, H2),
                  ((0, 0), (0, H2p - H2)))                                 # [1, H2p]
    b2s = jnp.asarray(b2, jnp.float32).reshape(1)
    return (gamma2, beta2, w1p, b1p, w2p, b2s)


def token_classifier(x, prepared_params):
    """x: [B, S, D] (f32 or bf16).  Returns [B, S, 1] in x.dtype."""
    gamma2, beta2, w1p, b1p, w2p, b2s = prepared_params
    B, S, D = x.shape
    H2p = w1p.shape[1]

    N = B * S
    x2d = x.reshape(N, D)
    x_bytes = jnp.dtype(x.dtype).itemsize

    vmem_limit = _vmem_limit_bytes()
    # Resident (single-buffered) parameter footprint.
    resident_bytes = (w1p.size * 2
                      + (b1p.size + w2p.size + gamma2.size + beta2.size) * 4)
    tile_n = _choose_tile_n(N, D, H2p, x_bytes, vmem_limit, resident_bytes)
    num_tiles = pl.cdiv(N, tile_n)          # ragged last block handled by Pallas masking

    out2d = pl.pallas_call(
        token_classifier_kernel,
        out_shape=jax.ShapeDtypeStruct((N, 1), x.dtype),
        grid=(num_tiles,),
        in_specs=[
            pl.BlockSpec((tile_n, D), lambda i: (i, 0)),            # x tile (pipelined)
            pl.BlockSpec(memory_space=pltpu.MemorySpace.VMEM),      # LN gamma (resident, 1 buf)
            pl.BlockSpec(memory_space=pltpu.MemorySpace.VMEM),      # LN beta  (resident, 1 buf)
            pl.BlockSpec(memory_space=pltpu.MemorySpace.VMEM),      # w1 bf16  (resident, 1 buf)
            pl.BlockSpec(memory_space=pltpu.MemorySpace.VMEM),      # b1       (resident, 1 buf)
            pl.BlockSpec(memory_space=pltpu.MemorySpace.VMEM),      # w2 row   (resident, 1 buf)
            pl.BlockSpec(memory_space=pltpu.MemorySpace.SMEM),      # b2 scalar
        ],
        out_specs=pl.BlockSpec((tile_n, 1), lambda i: (i, 0)),
        compiler_params=pltpu.CompilerParams(
            dimension_semantics=("parallel",),       # v7x: shard row tiles across 2 TCs
            vmem_limit_bytes=vmem_limit,
        ),
    )(x2d, gamma2, beta2, w1p, b1p, w2p, b2s)

    return out2d.reshape(B, S, 1)


def init_params(key, input_size, hidden_size):
    """Parameter shapes matching the torch module (Linear weights stored [in, out])."""
    h2 = hidden_size // 2
    k_w1, k_b1, k_w2, k_b2 = jax.random.split(key, 4)

    gamma = jnp.ones((input_size,), jnp.float32)     # LayerNorm weight
    beta = jnp.zeros((input_size,), jnp.float32)     # LayerNorm bias

    bound1 = 1.0 / math.sqrt(input_size)
    w1 = jax.random.uniform(k_w1, (input_size, h2), jnp.float32, -bound1, bound1)
    b1 = jax.random.uniform(k_b1, (h2,), jnp.float32, -bound1, bound1)

    bound2 = 1.0 / math.sqrt(h2)
    w2 = jax.random.uniform(k_w2, (h2,), jnp.float32, -bound2, bound2)
    b2 = jax.random.uniform(k_b2, (1,), jnp.float32, -bound2, bound2)

    return (gamma, beta, w1, b1, w2, b2)


def reference_forward(x, params):
    """Pure-JAX f32 reference (eval-mode forward of the torch module)."""
    gamma, beta, w1, b1, w2, b2 = params
    mean = jnp.mean(x, axis=-1, keepdims=True)
    var = jnp.mean((x - mean) ** 2, axis=-1, keepdims=True)
    xn = (x - mean) * jax.lax.rsqrt(var + LN_EPS) * gamma + beta
    h = xn @ w1 + b1
    g = 0.5 * h * (1.0 + jax.lax.erf(h / jnp.sqrt(2.0)))
    return g @ w2[:, None] + b2


if __name__ == "__main__":
    # Small shapes consistent with the module: batch=2, seq=8, input_size=32,
    # hidden_size=32 (=> fc out dim 16, final out dim 1).
    B, S, INPUT_SIZE, HIDDEN_SIZE = 2, 8, 32, 32

    key = jax.random.PRNGKey(0)
    k_x, k_p = jax.random.split(key)
    x = jax.random.normal(k_x, (B, S, INPUT_SIZE), jnp.float32)
    params = init_params(k_p, INPUT_SIZE, HIDDEN_SIZE)

    prepared = prepare_params(params)          # one-time, outside the forward path
    out = jax.block_until_ready(token_classifier(x, prepared))
    ref = reference_forward(x, params)

    assert out.shape == (B, S, 1), out.shape
    max_diff = float(jnp.max(jnp.abs(out - ref)))
    # bf16 MXU operands (f32 accumulate) => small numeric delta vs pure-f32 reference.
    assert jnp.allclose(out, ref, atol=2e-2, rtol=2e-2), f"mismatch vs reference: {max_diff}"

    print("KERNEL_OK")
</pallas_src>

<mosaic_0001>
module attributes {stable_mosaic.version = 11 : i64} {
  func.func @token_classifier_kernel(%arg0: i32, %arg1: memref<8x32xf32, #tpu.memory_space<vmem>>, %arg2: memref<1x32xf32, #tpu.memory_space<vmem>>, %arg3: memref<1x32xf32, #tpu.memory_space<vmem>>, %arg4: memref<32x128xbf16, #tpu.memory_space<vmem>>, %arg5: memref<1x128xf32, #tpu.memory_space<vmem>>, %arg6: memref<1x128xf32, #tpu.memory_space<vmem>>, %arg7: memref<1xf32, #tpu.memory_space<smem>>, %arg8: memref<8x1xf32, #tpu.memory_space<vmem>>) attributes {dimension_semantics = [#tpu.dimension_semantics<parallel>], iteration_bounds = array<i64: 2>, scalar_prefetch = 0 : i64, scratch_operands = 0 : i64, tpu.core_type = #tpu.core_type<tc>, window_params = [{transform_indices = @transform_0, window_bounds = array<i64: 8, 32>}, {pipeline_mode = #tpu.pipeline_mode<synchronous>, transform_indices = @transform_1, window_bounds = array<i64: 1, 32>}, {pipeline_mode = #tpu.pipeline_mode<synchronous>, transform_indices = @transform_2, window_bounds = array<i64: 1, 32>}, {pipeline_mode = #tpu.pipeline_mode<synchronous>, transform_indices = @transform_3, window_bounds = array<i64: 32, 128>}, {pipeline_mode = #tpu.pipeline_mode<synchronous>, transform_indices = @transform_4, window_bounds = array<i64: 1, 128>}, {pipeline_mode = #tpu.pipeline_mode<synchronous>, transform_indices = @transform_5, window_bounds = array<i64: 1, 128>}, {transform_indices = @transform_6, window_bounds = array<i64: 1>}, {transform_indices = @transform_7, window_bounds = array<i64: 8, 1>}]} {
    %c0 = arith.constant 0 : index
    %c0_0 = arith.constant 0 : index
    %0 = vector.load %arg1[%c0, %c0_0] : memref<8x32xf32, #tpu.memory_space<vmem>>, vector<8x32xf32>
    %cst = arith.constant dense<0.000000e+00> : vector<8xf32>
    %1 = vector.multi_reduction <add>, %0, %cst [1] : vector<8x32xf32> to vector<8xf32>
    %2 = vector.shape_cast %1 : vector<8xf32> to vector<8x1xf32>
    %cst_1 = arith.constant 3.200000e+01 : f32
    %3 = vector.broadcast %cst_1 : f32 to vector<8x1xf32>
    %4 = arith.divf %2, %3 : vector<8x1xf32>
    %5 = vector.broadcast %4 : vector<8x1xf32> to vector<8x32xf32>
    %6 = arith.subf %0, %5 : vector<8x32xf32>
    %7 = arith.mulf %6, %6 : vector<8x32xf32>
    %cst_2 = arith.constant dense<0.000000e+00> : vector<8xf32>
    %8 = vector.multi_reduction <add>, %7, %cst_2 [1] : vector<8x32xf32> to vector<8xf32>
    %9 = vector.shape_cast %8 : vector<8xf32> to vector<8x1xf32>
    %cst_3 = arith.constant 3.200000e+01 : f32
    %10 = vector.broadcast %cst_3 : f32 to vector<8x1xf32>
    %11 = arith.divf %9, %10 : vector<8x1xf32>
    %cst_4 = arith.constant 9.99999974E-6 : f32
    %12 = vector.broadcast %cst_4 : f32 to vector<8x1xf32>
    %13 = arith.addf %11, %12 : vector<8x1xf32>
    %14 = math.rsqrt %13 : vector<8x1xf32>
    %15 = vector.broadcast %14 : vector<8x1xf32> to vector<8x32xf32>
    %16 = arith.mulf %6, %15 : vector<8x32xf32>
    %c0_5 = arith.constant 0 : index
    %c0_6 = arith.constant 0 : index
    %17 = vector.load %arg2[%c0_5, %c0_6] : memref<1x32xf32, #tpu.memory_space<vmem>>, vector<1x32xf32>
    %18 = vector.broadcast %17 : vector<1x32xf32> to vector<8x32xf32>
    %19 = arith.mulf %16, %18 : vector<8x32xf32>
    %c0_7 = arith.constant 0 : index
    %c0_8 = arith.constant 0 : index
    %20 = vector.load %arg3[%c0_7, %c0_8] : memref<1x32xf32, #tpu.memory_space<vmem>>, vector<1x32xf32>
    %21 = vector.broadcast %20 : vector<1x32xf32> to vector<8x32xf32>
    %22 = arith.addf %19, %21 : vector<8x32xf32>
    %23 = arith.truncf %22 : vector<8x32xf32> to vector<8x32xbf16>
    %c0_9 = arith.constant 0 : index
    %c0_10 = arith.constant 0 : index
    %24 = vector.load %arg4[%c0_9, %c0_10] : memref<32x128xbf16, #tpu.memory_space<vmem>>, vector<32x128xbf16>
    %cst_11 = arith.constant dense<0.000000e+00> : vector<8x128xf32>
    %25 = tpu.matmul %23, %24, %cst_11 {dimension_numbers = #tpu.dot_dimension_numbers<[1], [0], [0], [1], [0, 0, 1, 1], [], []>} : vector<8x32xbf16>, vector<32x128xbf16>, vector<8x128xf32> -> vector<8x128xf32>
    %c0_12 = arith.constant 0 : index
    %c0_13 = arith.constant 0 : index
    %26 = vector.load %arg5[%c0_12, %c0_13] : memref<1x128xf32, #tpu.memory_space<vmem>>, vector<1x128xf32>
    %27 = vector.broadcast %26 : vector<1x128xf32> to vector<8x128xf32>
    %28 = arith.addf %25, %27 : vector<8x128xf32>
    %cst_14 = arith.constant 5.000000e-01 : f32
    %29 = vector.broadcast %cst_14 : f32 to vector<8x128xf32>
    %30 = arith.mulf %29, %28 : vector<8x128xf32>
    %cst_15 = arith.constant 0.707106769 : f32
    %31 = vector.broadcast %cst_15 : f32 to vector<8x128xf32>
    %32 = arith.mulf %28, %31 : vector<8x128xf32>
    %33 = math.erf %32 : vector<8x128xf32>
    %cst_16 = arith.constant 1.000000e+00 : f32
    %34 = vector.broadcast %cst_16 : f32 to vector<8x128xf32>
    %35 = arith.addf %34, %33 : vector<8x128xf32>
    %36 = arith.mulf %30, %35 : vector<8x128xf32>
    %c0_17 = arith.constant 0 : index
    %c0_18 = arith.constant 0 : index
    %37 = vector.load %arg6[%c0_17, %c0_18] : memref<1x128xf32, #tpu.memory_space<vmem>>, vector<1x128xf32>
    %38 = vector.broadcast %37 : vector<1x128xf32> to vector<8x128xf32>
    %39 = arith.mulf %36, %38 : vector<8x128xf32>
    %cst_19 = arith.constant dense<0.000000e+00> : vector<8xf32>
    %40 = vector.multi_reduction <add>, %39, %cst_19 [1] : vector<8x128xf32> to vector<8xf32>
    %41 = vector.shape_cast %40 : vector<8xf32> to vector<8x1xf32>
    %c0_20 = arith.constant 0 : index
    %42 = memref.load %arg7[%c0_20] : memref<1xf32, #tpu.memory_space<smem>>
    %43 = vector.broadcast %42 : f32 to vector<8x1xf32>
    %44 = arith.addf %41, %43 : vector<8x1xf32>
    %c0_21 = arith.constant 0 : index
    %c0_22 = arith.constant 0 : index
    %45 = vector.load %arg8[%c0_21, %c0_22] : memref<8x1xf32, #tpu.memory_space<vmem>>, vector<8x1xf32>
    tpu.vector_store %arg8[%c0_21, %c0_22], %44 {strides = array<i32>} : memref<8x1xf32, #tpu.memory_space<vmem>>, vector<8x1xf32>,
    return
  }
  func.func @transform_0(%arg0: i32) -> (i32, i32) {
    %c0_i32 = arith.constant 0 : i32
    %c0_i32_0 = arith.constant 0 : i32
    return %arg0, %c0_i32 : i32, i32
  }
  func.func @transform_1(%arg0: i32) -> (i32, i32) {
    %c0_i32 = arith.constant 0 : i32
    %c0_i32_0 = arith.constant 0 : i32
    %c0_i32_1 = arith.constant 0 : i32
    return %c0_i32, %c0_i32_0 : i32, i32
  }
  func.func @transform_2(%arg0: i32) -> (i32, i32) {
    %c0_i32 = arith.constant 0 : i32
    %c0_i32_0 = arith.constant 0 : i32
    %c0_i32_1 = arith.constant 0 : i32
    return %c0_i32, %c0_i32_0 : i32, i32
  }
  func.func @transform_3(%arg0: i32) -> (i32, i32) {
    %c0_i32 = arith.constant 0 : i32
    %c0_i32_0 = arith.constant 0 : i32
    %c0_i32_1 = arith.constant 0 : i32
    return %c0_i32, %c0_i32_0 : i32, i32
  }
  func.func @transform_4(%arg0: i32) -> (i32, i32) {
    %c0_i32 = arith.constant 0 : i32
    %c0_i32_0 = arith.constant 0 : i32
    %c0_i32_1 = arith.constant 0 : i32
    return %c0_i32, %c0_i32_0 : i32, i32
  }
  func.func @transform_5(%arg0: i32) -> (i32, i32) {
    %c0_i32 = arith.constant 0 : i32
    %c0_i32_0 = arith.constant 0 : i32
    %c0_i32_1 = arith.constant 0 : i32
    return %c0_i32, %c0_i32_0 : i32, i32
  }
  func.func @transform_6(%arg0: i32) -> i32 {
    %c0_i32 = arith.constant 0 : i32
    %c0_i32_0 = arith.constant 0 : i32
    return %c0_i32 : i32
  }
  func.func @transform_7(%arg0: i32) -> (i32, i32) {
    %c0_i32 = arith.constant 0 : i32
    %c0_i32_0 = arith.constant 0 : i32
    return %arg0, %c0_i32 : i32, i32
  }
}

</mosaic_0001>

<llo_original>
// kernel: tpu_custom_call.1
$region0: #{tpu_custom_call.1}
  #allocation0 [shape = 'u32[]', space=smem, size = 0x4, offset = 0x4, fixed_abs, tag = 'smem constant byte address 0x4 - core index']
  #allocation1 [shape = 'u32[144,128]{1,0:T(1,128)}', space=vmem, size = 0x12000, scoped, tag = 'internal scratch']
  #allocation2 [shape = 'f32[1]{0:T(128)S(6)}', space=smem, size = 0x200, scoped, tag = 'scoped memory for tpu_custom_call.1']
  %s0 = inlined_call_operand.hbm [shape: f32[16,32], index: 0, kind: input, shape index: {}]
  %s1 = inlined_call_operand.vmem [shape: f32[1,32], index: 1, kind: input, shape index: {}]
  %s2 = inlined_call_operand.vmem [shape: f32[1,32], index: 2, kind: input, shape index: {}]
  %s3 = inlined_call_operand.hbm [shape: bf16[32,128], index: 3, kind: input, shape index: {}]
  %s4 = inlined_call_operand.vmem [shape: f32[1,128], index: 4, kind: input, shape index: {}]
  %s5 = inlined_call_operand.vmem [shape: f32[1,128], index: 5, kind: input, shape index: {}]
  %s6 = inlined_call_operand.<no memory space> [shape: f32[1], index: 6, kind: input, shape index: {}]
  %s7 = inlined_call_operand.vmem [shape: f32[16,1], index: 7, kind: output, shape index: {}]
  %s8 = sld [smem:[#allocation0]]
  $region69: #{tpu_custom_call.1} parent=0
    _
  %s10 = ssub.s32 1, %s8
  %s11 = scalar_select 0, %s10, %s8
  %12 = sst [smem:[#allocation2]] %s6
  $region1: #{tpu_custom_call.1} parent=0
    #allocation3 [shape = 'u8[8192]{0}', space=vmem, size = 0x2000, scoped, tag = 'input window, operand 0']
    #allocation4 [shape = 's32[2]{0}', space=sflag, size = 0x8, scoped, tag = 'scoped memory for tpu_custom_call.1']
    #allocation5 [shape = 'u8[8192]{0}', space=vmem, size = 0x2000, scoped, tag = 'input window, operand 3, single buffered']
    #allocation6 [shape = 's32[1]{0}', space=sflag, size = 0x4, scoped, tag = 'scoped memory for tpu_custom_call.1']
    %13 = vsyncpa [#allocation4], 0
    %s14 = scalar_lea.sflag [#allocation4], 1
    %15 = vsyncpa %s14, 0
    %16 = vsyncpa [#allocation6], 0
    loop: start=0, step=1, limit=4
    $region2: #{tpu_custom_call.1} parent=1 // loop_pre_header
      _
    $region3: #{tpu_custom_call.1} parent=1 // loop_header
      %s18 = sphi 0, %s22
      %p19 = scmp.ge.s32.totalorder %s18, 4
      %s28 = sphi 0, %s30
      %s31 = sphi 0, %s28
      %s32 = sphi 0, %s31
      %s48 = sphi 0, %s32
      %s52 = sphi 0, %s52
      %s54 = sphi 0, %s52
      %s55 = sphi 0, %s54
      %s69 = sphi 0, %s55
      %s73 = sphi 0, %s73
      %s75 = sphi 0, %s73
      %s76 = sphi 0, %s75
      %s90 = sphi 0, %s76
      %s94 = sphi 0, %s94
      %s96 = sphi 0, %s94
      %s97 = sphi 0, %s96
      %s111 = sphi 0, %s97
      %s115 = sphi 0, %s115
      %s117 = sphi 0, %s115
      %s118 = sphi 0, %s117
      %s132 = sphi 0, %s118
      %s136 = sphi 0, %s136
      %s138 = sphi 0, %s136
      %s139 = sphi 0, %s138
      %s153 = sphi 0, %s139
      %s157 = sphi 0, %s157
      %s159 = sphi 0, %s157
      %s160 = sphi 0, %s159
      %s174 = sphi 0, %s160
      %s180 = sphi 0, %s182
      %s183 = sphi 0, %s180
      %s184 = sphi 0, %s183
      %s200 = sphi 0, %s184
    $region4: #{tpu_custom_call.1} parent=1 // loop_header_branch
      %21 = sbr.rel (%p19) target = $region8
    $region5: #{tpu_custom_call.1} parent=1 // loop_body
      %s23 = ssub.s32 %s18, 1
      %s24 = ssub.s32 %s18, 2
      %s25 = sadd.s32 %s18, 1
      %s26 = ssub.s32 %s18, %s25
      %p27 = scmp.eq.s32.totalorder %s26, 0
      %s29 = sadd.s32 %s28, 1
      %s30 = scalar_select %p27, %s28, %s29
      %p33 = pneg %p27
      %p34 = scmp.eq.s32.totalorder %s18, 1
      %p35 = por %p33, %p34
      %p36 = scmp.ne.s32.totalorder %s28, %s31
      %p37 = scmp.eq.s32.totalorder %s18, 0
      %p38 = por %p36, %p37
      %p39 = scmp.ne.s32.totalorder %s28, %s31
      %p40 = scmp.eq.s32.totalorder %s23, 1
      %p41 = por %p39, %p40
      %p42 = scmp.ne.s32.totalorder %s31, %s32
      %p43 = scmp.eq.s32.totalorder %s23, 0
      %p44 = por %p42, %p43
      %p45 = scmp.ne.s32.totalorder %s31, %s32
      %p46 = scmp.eq.s32.totalorder %s24, 1
      %p47 = por %p45, %p46
      %p49 = scmp.ne.s32.totalorder %s32, %s48
      %p50 = scmp.eq.s32.totalorder %s24, 0
      %p51 = por %p49, %p50
      %s53 = sadd.s32 %s52, 1
      %p56 = scmp.eq.s32.totalorder %s18, 1
      %p57 = scmp.ne.s32.totalorder %s52, %s54
      %p58 = scmp.eq.s32.totalorder %s18, 0
      %p59 = por %p57, %p58
      %p60 = scmp.ne.s32.totalorder %s52, %s54
      %p61 = scmp.eq.s32.totalorder %s23, 1
      %p62 = por %p60, %p61
      %p63 = scmp.ne.s32.totalorder %s54, %s55
      %p64 = scmp.eq.s32.totalorder %s23, 0
      %p65 = por %p63, %p64
      %p66 = scmp.ne.s32.totalorder %s54, %s55
      %p67 = scmp.eq.s32.totalorder %s24, 1
      %p68 = por %p66, %p67
      %p70 = scmp.ne.s32.totalorder %s55, %s69
      %p71 = scmp.eq.s32.totalorder %s24, 0
      %p72 = por %p70, %p71
      %s74 = sadd.s32 %s73, 1
      %p77 = scmp.eq.s32.totalorder %s18, 1
      %p78 = scmp.ne.s32.totalorder %s73, %s75
      %p79 = scmp.eq.s32.totalorder %s18, 0
      %p80 = por %p78, %p79
      %p81 = scmp.ne.s32.totalorder %s73, %s75
      %p82 = scmp.eq.s32.totalorder %s23, 1
      %p83 = por %p81, %p82
      %p84 = scmp.ne.s32.totalorder %s75, %s76
      %p85 = scmp.eq.s32.totalorder %s23, 0
      %p86 = por %p84, %p85
      %p87 = scmp.ne.s32.totalorder %s75, %s76
      %p88 = scmp.eq.s32.totalorder %s24, 1
      %p89 = por %p87, %p88
      %p91 = scmp.ne.s32.totalorder %s76, %s90
      %p92 = scmp.eq.s32.totalorder %s24, 0
      %p93 = por %p91, %p92
      %s95 = sadd.s32 %s94, 1
      %p98 = scmp.eq.s32.totalorder %s18, 1
      %p99 = scmp.ne.s32.totalorder %s94, %s96
      %p100 = scmp.eq.s32.totalorder %s18, 0
      %p101 = por %p99, %p100
      %p102 = scmp.ne.s32.totalorder %s94, %s96
      %p103 = scmp.eq.s32.totalorder %s23, 1
      %p104 = por %p102, %p103
      %p105 = scmp.ne.s32.totalorder %s96, %s97
      %p106 = scmp.eq.s32.totalorder %s23, 0
      %p107 = por %p105, %p106
      %p108 = scmp.ne.s32.totalorder %s96, %s97
      %p109 = scmp.eq.s32.totalorder %s24, 1
      %p110 = por %p108, %p109
      %p112 = scmp.ne.s32.totalorder %s97, %s111
      %p113 = scmp.eq.s32.totalorder %s24, 0
      %p114 = por %p112, %p113
      %s116 = sadd.s32 %s115, 1
      %p119 = scmp.eq.s32.totalorder %s18, 1
      %p120 = scmp.ne.s32.totalorder %s115, %s117
      %p121 = scmp.eq.s32.totalorder %s18, 0
      %p122 = por %p120, %p121
      %p123 = scmp.ne.s32.totalorder %s115, %s117
      %p124 = scmp.eq.s32.totalorder %s23, 1
      %p125 = por %p123, %p124
      %p126 = scmp.ne.s32.totalorder %s117, %s118
      %p127 = scmp.eq.s32.totalorder %s23, 0
      %p128 = por %p126, %p127
      %p129 = scmp.ne.s32.totalorder %s117, %s118
      %p130 = scmp.eq.s32.totalorder %s24, 1
      %p131 = por %p129, %p130
      %p133 = scmp.ne.s32.totalorder %s118, %s132
      %p134 = scmp.eq.s32.totalorder %s24, 0
      %p135 = por %p133, %p134
      %s137 = sadd.s32 %s136, 1
      %p140 = scmp.eq.s32.totalorder %s18, 1
      %p141 = scmp.ne.s32.totalorder %s136, %s138
      %p142 = scmp.eq.s32.totalorder %s18, 0
      %p143 = por %p141, %p142
      %p144 = scmp.ne.s32.totalorder %s136, %s138
      %p145 = scmp.eq.s32.totalorder %s23, 1
      %p146 = por %p144, %p145
      %p147 = scmp.ne.s32.totalorder %s138, %s139
      %p148 = scmp.eq.s32.totalorder %s23, 0
      %p149 = por %p147, %p148
      %p150 = scmp.ne.s32.totalorder %s138, %s139
      %p151 = scmp.eq.s32.totalorder %s24, 1
      %p152 = por %p150, %p151
      %p154 = scmp.ne.s32.totalorder %s139, %s153
      %p155 = scmp.eq.s32.totalorder %s24, 0
      %p156 = por %p154, %p155
      %s158 = sadd.s32 %s157, 1
      %p161 = scmp.eq.s32.totalorder %s18, 1
      %p162 = scmp.ne.s32.totalorder %s157, %s159
      %p163 = scmp.eq.s32.totalorder %s18, 0
      %p164 = por %p162, %p163
      %p165 = scmp.ne.s32.totalorder %s157, %s159
      %p166 = scmp.eq.s32.totalorder %s23, 1
      %p167 = por %p165, %p166
      %p168 = scmp.ne.s32.totalorder %s159, %s160
      %p169 = scmp.eq.s32.totalorder %s23, 0
      %p170 = por %p168, %p169
      %p171 = scmp.ne.s32.totalorder %s159, %s160
      %p172 = scmp.eq.s32.totalorder %s24, 1
      %p173 = por %p171, %p172
      %p175 = scmp.ne.s32.totalorder %s160, %s174
      %p176 = scmp.eq.s32.totalorder %s24, 0
      %p177 = por %p175, %p176
      %s178 = ssub.s32 %s18, %s25
      %p179 = scmp.eq.s32.totalorder %s178, 0
      %s181 = sadd.s32 %s180, 1
      %s182 = scalar_select %p179, %s180, %s181
      %p185 = pneg %p179
      %p186 = scmp.eq.s32.totalorder %s18, 1
      %p187 = por %p185, %p186
      %p188 = scmp.ne.s32.totalorder %s180, %s183
      %p189 = scmp.eq.s32.totalorder %s18, 0
      %p190 = por %p188, %p189
      %p191 = scmp.ne.s32.totalorder %s180, %s183
      %p192 = scmp.eq.s32.totalorder %s23, 1
      %p193 = por %p191, %p192
      %p194 = scmp.ne.s32.totalorder %s183, %s184
      %p195 = scmp.eq.s32.totalorder %s23, 0
      %p196 = por %p194, %p195
      %p197 = scmp.ne.s32.totalorder %s183, %s184
      %p198 = scmp.eq.s32.totalorder %s24, 1
      %p199 = por %p197, %p198
      %p201 = scmp.ne.s32.totalorder %s184, %s200
      %p202 = scmp.eq.s32.totalorder %s24, 0
      %p203 = por %p201, %p202
      %p204 = scmp.le.s32.totalorder 1, %s18
      %p205 = scmp.lt.s32.totalorder %s18, 3
      %p206 = pnand %p204, %p205
      %p207 = pneg %p206
      // Predicated region
      $region9: #{tpu_custom_call.1} parent=5 // pred_check
        _
      $region10: #{tpu_custom_call.1} parent=5 // pred_check_branch
        %209 = sbr.rel (%p206) target = $region12
      $region11: #{tpu_custom_call.1} parent=5 // pred_region
        %s210 = ssub.s32 %s18, 1
        // Predicated region
        $region13: #{tpu_custom_call.1} parent=11 // pred_check
          %p211 = pneg %p65
        $region14: #{tpu_custom_call.1} parent=11 // pred_check_branch
          %213 = sbr.rel (%p211) target = $region16
        $region15: #{tpu_custom_call.1} parent=11 // pred_region
          _
        $region16: #{tpu_custom_call.1} parent=11 // pred_fallthru
          _
        // Predicated region
        $region17: #{tpu_custom_call.1} parent=11 // pred_check
          %p214 = pneg %p86
        $region18: #{tpu_custom_call.1} parent=11 // pred_check_branch
          %216 = sbr.rel (%p214) target = $region20
        $region19: #{tpu_custom_call.1} parent=11 // pred_region
          _
        $region20: #{tpu_custom_call.1} parent=11 // pred_fallthru
          _
        // Predicated region
        $region21: #{tpu_custom_call.1} parent=11 // pred_check
          %p217 = pneg %p107
        $region22: #{tpu_custom_call.1} parent=11 // pred_check_branch
          %219 = sbr.rel (%p217) target = $region24
        $region23: #{tpu_custom_call.1} parent=11 // pred_region
          %s221 = ssub.s32 256, 256
          %222 = vsyncadd [#allocation6], %s221
          %s223 = sshll.u32 [#allocation5], 4
          %s224 = int_to_ptr.vmem [resolvable:$true] %s223
          %229 = dma.hbm_to_vmem [thread:$0]  %s3, 256, %s224, [#allocation6], 64, 64, 4
        $region24: #{tpu_custom_call.1} parent=11 // pred_fallthru
          _
        // Predicated region
        $region25: #{tpu_custom_call.1} parent=11 // pred_check
          %p230 = pneg %p128
        $region26: #{tpu_custom_call.1} parent=11 // pred_check_branch
          %232 = sbr.rel (%p230) target = $region28
        $region27: #{tpu_custom_call.1} parent=11 // pred_region
          _
        $region28: #{tpu_custom_call.1} parent=11 // pred_fallthru
          _
        // Predicated region
        $region29: #{tpu_custom_call.1} parent=11 // pred_check
          %p233 = pneg %p149
        $region30: #{tpu_custom_call.1} parent=11 // pred_check_branch
          %235 = sbr.rel (%p233) target = $region32
        $region31: #{tpu_custom_call.1} parent=11 // pred_region
          _
        $region32: #{tpu_custom_call.1} parent=11 // pred_fallthru
          _
        // Predicated region
        $region33: #{tpu_custom_call.1} parent=11 // pred_check
          %p236 = pneg %p170
        $region34: #{tpu_custom_call.1} parent=11 // pred_check_branch
          %238 = sbr.rel (%p236) target = $region36
        $region35: #{tpu_custom_call.1} parent=11 // pred_region
          _
        $region36: #{tpu_custom_call.1} parent=11 // pred_fallthru
          _
      $region12: #{tpu_custom_call.1} parent=5 // pred_fallthru
        _
      %p239 = scmp.lt.s32.totalorder %s18, 2
      // Predicated region
      $region37: #{tpu_custom_call.1} parent=5 // pred_check
        %p240 = pneg %p239
      $region38: #{tpu_custom_call.1} parent=5 // pred_check_branch
        %242 = sbr.rel (%p240) target = $region40
      $region39: #{tpu_custom_call.1} parent=5 // pred_region
        // Predicated region
        $region41: #{tpu_custom_call.1} parent=39 // pred_check
          %p243 = pneg %p38
        $region42: #{tpu_custom_call.1} parent=39 // pred_check_branch
          %245 = sbr.rel (%p243) target = $region44
        $region43: #{tpu_custom_call.1} parent=39 // pred_region
          %s246 = sand.u32 %s28, 1
          %s247 = scalar_lea.sflag [#allocation4], %s246
          %s248 = sand.u32 %s28, 1
          %s249 = smul.addr %s248, 8
          %s250 = scalar_lea.vmem [#allocation3], %s249
          %s252 = ssub.s32 128, 128
          %253 = vsyncadd %s247, %s252
          %s254 = smul.addr %s18, 128
          %s255 = scalar_lea.hbm %s0, %s254
          %s257 = sshll.u32 %s250, 4
          %s258 = int_to_ptr.vmem [resolvable:$true] %s257
          %260 = dma.hbm_to_vmem [thread:$0]  %s255, 128, %s258, %s247
        $region44: #{tpu_custom_call.1} parent=39 // pred_fallthru
          _
      $region40: #{tpu_custom_call.1} parent=5 // pred_fallthru
        _
      %p261 = scmp.le.s32.totalorder 1, %s18
      %p262 = scmp.lt.s32.totalorder %s18, 3
      %p263 = pnand %p261, %p262
      %p264 = pneg %p263
      // Predicated region
      $region45: #{tpu_custom_call.1} parent=5 // pred_check
        _
      $region46: #{tpu_custom_call.1} parent=5 // pred_check_branch
        %266 = sbr.rel (%p263) target = $region48
      $region47: #{tpu_custom_call.1} parent=5 // pred_region
        %s267 = ssub.s32 %s18, 1
        %s268 = sand.u32 %s31, 1
        %s269 = scalar_lea.sflag [#allocation4], %s268
        %s270 = sand.u32 %s31, 1
        %s271 = smul.addr %s270, 8
        %s272 = scalar_lea.vmem [#allocation3], %s271
        // Predicated region
        $region49: #{tpu_custom_call.1} parent=47 // pred_check
          %p273 = pneg %p44
        $region50: #{tpu_custom_call.1} parent=47 // pred_check_branch
          %275 = sbr.rel (%p273) target = $region52
        $region51: #{tpu_custom_call.1} parent=47 // pred_region
          %276 = dma.done %s269, 128
        $region52: #{tpu_custom_call.1} parent=47 // pred_fallthru
          _
        // Predicated region
        $region53: #{tpu_custom_call.1} parent=47 // pred_check
          %p277 = pneg %p107
        $region54: #{tpu_custom_call.1} parent=47 // pred_check_branch
          %279 = sbr.rel (%p277) target = $region56
        $region55: #{tpu_custom_call.1} parent=47 // pred_region
          %280 = dma.done [#allocation6], 256
        $region56: #{tpu_custom_call.1} parent=47 // pred_fallthru
          _
        %s281 = sand.u32 %s31, 1
        %s282 = scalar_lea.sflag [#allocation4], %s281
        %s283 = sand.u32 %s31, 1
        %s284 = smul.addr %s283, 8
        %s285 = scalar_lea.vmem [#allocation3], %s284
        %p286 = pneg %p44
        %p287 = pneg %p41
        %p288 = pneg %p65
        %p289 = pneg %p62
        %p290 = pneg %p86
        %p291 = pneg %p83
        %p292 = pneg %p107
        %p293 = pneg %p104
        %p294 = pneg %p128
        %p295 = pneg %p125
        %p296 = pneg %p149
        %p297 = pneg %p146
        %p298 = pneg %p170
        %p299 = pneg %p167
        %p300 = pneg %p196
        %p301 = pneg %p193
        %p302 = scmp.lt.s32.totalorder %s23, 1
        %s303 = scalar_select %p302, %s23, 1
        %s304 = smul.addr %s303, 8
        %s305 = scalar_lea.vmem %s7, %s304
        %p306 = scmp.lt.s32.totalorder %s23, 1
        %s307 = scalar_select %p306, %s23, 1
        %s308 = smul.addr %s307, 8
        %s309 = scalar_lea.vmem %s7, %s308
        %v311 = vld [vmem:[%s272] sm:$0xff]
        %vm312 = vcmask 261120
        %v313 = vsel %vm312, %v311, 0.0
        %314 = vadd.xlane.f32.xlu0 %v313
        %v315 = vpop.xlane.xlu0 %314
        %v316 = vrcp.pop 32.0
        %v317 = vmul.f32 %v315, %v316
        %v318 = vsub.f32 %v311, %v317
        %v319 = vmul.f32 %v318, %v318
        %v320 = vsel %vm312, %v319, 0.0
        %321 = vadd.xlane.f32.xlu0 %v320
        %v322 = vpop.xlane.xlu0 %321
        %v323 = vmul.f32 %v322, %v316
        %v324 = vadd.f32 %v323, 1e-05
        %v325 = vrsqrt.pop %v324
        %v326 = vmul.f32 %v318, %v325
        %v327 = vld [vmem:[%s1] sm:$0x1]
        %v329 = vlaneseq
        %v330 = vshrl.u32 %v329, 7
        %v331 = vsub.s32 0, %v330
        %v332 = vrot.slane %v327, %v331
        %v334 = vmul.f32 %v326, %v332
        %v335 = vld [vmem:[%s2] sm:$0x1]
        %v337 = vlaneseq
        %v338 = vshrl.u32 %v337, 7
        %v339 = vsub.s32 0, %v338
        %v340 = vrot.slane %v335, %v339
        %v342 = vadd.f32 %v334, %v340
        %v343 = vpack.c.bf16 %v342, %v342
        %v344 = vld [vmem:[#allocation5] sm:$0xf]
        %v345 = vld [vmem:[#allocation5 + $0x4] sm:$0xf]
        %v346 = vld [vmem:[#allocation5 + $0x8] sm:$0xf]
        %v347 = vld [vmem:[#allocation5 + $0xc] sm:$0xf]
        %v348 = vld [vmem:[%s4] sm:$0x1]
        %v350 = vlaneseq
        %v351 = vshrl.u32 %v350, 7
        %v352 = vsub.s32 0, %v351
        %v353 = vrot.slane %v348, %v352
        %v359 = vunpack.c.l.b16 %v344
        %v360 = vunpack.c.l.b16 %v345
        %v361 = vunpack.c.l.b16 %v346
        %v362 = vunpack.c.l.b16 %v347
        %v363 = vpack.c.b16 %v360, %v359
        %v364 = vpack.c.b16 %v362, %v361
        %v368 = vsel %vm312, %v343, 0
        %370 = vmatprep.subr.bf16.mxu0 0
        %371 = vmatpush1.bf16.msra.mxu0 0
        %372 = vmatprep.subr.bf16.mxu0 0
        %373 = vmatpush1.bf16.msra.mxu0 0
        %374 = vmatprep.subr.bf16.mxu0 0
        %375 = vmatpush1.bf16.msra.mxu0 0
        %376 = vmatprep.subr.bf16.mxu0 0
        %377 = vmatpush1.bf16.msra.mxu0 0
        %378 = vmatprep.subr.bf16.mxu0 0
        %379 = vmatpush1.bf16.msra.mxu0 0
        %380 = vmatprep.subr.bf16.mxu0 0
        %381 = vmatpush1.bf16.msra.mxu0 0
        %382 = vmatprep.subr.bf16.mxu0 0
        %383 = vmatpush1.bf16.msra.mxu0 %v364
        %384 = vmatprep.subr.bf16.mxu0 0
        %385 = vmatpush1.bf16.msra.mxu0 %v363
        %386 = vmatprep.subr.bf16.mxu0 0
        %387 = vmatpush2.bf16.msra.mxu0 0
        %388 = vmatprep.subr.bf16.mxu0 0
        %389 = vmatpush2.bf16.msra.mxu0 0
        %390 = vmatprep.subr.bf16.mxu0 0
        %391 = vmatpush2.bf16.msra.mxu0 0
        %392 = vmatprep.subr.bf16.mxu0 0
        %393 = vmatpush2.bf16.msra.mxu0 0
        %394 = vmatprep.subr.bf16.mxu0 0
        %395 = vmatpush2.bf16.msra.mxu0 0
        %396 = vmatprep.subr.bf16.mxu0 0
        %397 = vmatpush2.bf16.msra.mxu0 0
        %398 = vmatprep.subr.bf16.mxu0 0
        %399 = vmatpush2.bf16.msra.mxu0 0
        %400 = vmatprep.subr.bf16.mxu0 0
        %401 = vmatpush2.bf16.msra.mxu0 0
        %402 = vmatprep.mubr.bf16.mxu0 0
        %403 = vmatmul.mubr.bf16.gmra.mxu0 %v368
        %v404 = vpop.f32.mrf.mxu0
        %v405 = vadd.f32 %v353, %v404
        %v406 = vpop.f32.mrf.mxu0
        %v407 = vpop.f32.mrf.mxu0
        %v408 = vpop.f32.mrf.mxu0
        %409 = vdwg.mxu0
        %v410 = vmul.f32 %v405, 0.5
        %v411 = vmul.f32 %v405, 0.70710677
        %v412 = verf.f32.pop %v411
        %v413 = vadd.f32 %v412, 1.0
        %v414 = vmul.f32 %v410, %v413
        %v415 = vld [vmem:[%s5] sm:$0x1]
        %v417 = vlaneseq
        %v418 = vshrl.u32 %v417, 7
        %v419 = vsub.s32 0, %v418
        %v420 = vrot.slane %v415, %v419
        %v422 = vmul.f32 %v414, %v420
        %423 = vadd.xlane.f32.xlu0 %v422
        %v424 = vpop.xlane.xlu0 %423
        %s425 = sld [smem:[#allocation2]]
        %v426 = vstv %s425
        %v427 = vadd.f32 %v424, %v426
        %vm428 = vcmask 7168
        %429 = vst.msk [vmem:[%s309] sm:$0xff] %vm428, %v427
        %p430 = scmp.lt.s32.totalorder %s23, 1
        %s431 = scalar_select %p430, %s23, 1
        %s432 = smul.addr %s431, 8
        %s433 = scalar_lea.vmem %s7, %s432
        // Predicated region
        $region57: #{tpu_custom_call.1} parent=47 // pred_check
          %p434 = pneg %p193
        $region58: #{tpu_custom_call.1} parent=47 // pred_check_branch
          %436 = sbr.rel (%p434) target = $region60
        $region59: #{tpu_custom_call.1} parent=47 // pred_region
          _
        $region60: #{tpu_custom_call.1} parent=47 // pred_fallthru
          _
      $region48: #{tpu_custom_call.1} parent=5 // pred_fallthru
        _
      %p437 = scmp.le.s32.totalorder 2, %s18
      // Predicated region
      $region61: #{tpu_custom_call.1} parent=5 // pred_check
        %p438 = pneg %p437
      $region62: #{tpu_custom_call.1} parent=5 // pred_check_branch
        %440 = sbr.rel (%p438) target = $region64
      $region63: #{tpu_custom_call.1} parent=5 // pred_region
        %s441 = ssub.s32 %s18, 2
        // Predicated region
        $region65: #{tpu_custom_call.1} parent=63 // pred_check
          %p442 = pneg %p199
        $region66: #{tpu_custom_call.1} parent=63 // pred_check_branch
          %444 = sbr.rel (%p442) target = $region68
        $region67: #{tpu_custom_call.1} parent=63 // pred_region
          %p445 = scmp.lt.s32.totalorder %s24, 1
          %s446 = scalar_select %p445, %s24, 1
          %s447 = smul.addr %s446, 8
          %s448 = scalar_lea.vmem %s7, %s447
        $region68: #{tpu_custom_call.1} parent=63 // pred_fallthru
          _
      $region64: #{tpu_custom_call.1} parent=5 // pred_fallthru
        _
    $region6: #{tpu_custom_call.1} parent=1 // loop_footer
      %s22 = sadd.s32 1, %s18
    $region7: #{tpu_custom_call.1} parent=1 // loop_footer_branch
      %17 = sbr.rel target = $region3
    $region8: #{tpu_custom_call.1} parent=1 // loop_exit
      _
    %449 = vsyncpa [#allocation4], 1
    %s450 = scalar_lea.sflag [#allocation4], 1
    %451 = vsyncpa %s450, 1
    %452 = vsyncpa [#allocation6], 1

</llo_original>
